<compile_context>
chip_gen: v7x
topology: tpu7x:2x2x1
jax: 0.10.0
libtpu: 0.0.40
codegen_flags: <defaults>
</compile_context>

<pallas_src>
import jax
import jax.numpy as jnp
from jax.experimental import pallas as pl
from jax.experimental.pallas import tpu as pltpu


def _round_up(x, m):
    return ((x + m - 1) // m) * m


def _cbow_kernel(val_ref, mask_ref, out_ref):
    # val_ref : (TB, N, D), mask_ref : (TB, N), out_ref : (TB, Dp) with Dp % 128 == 0
    tb, n, d = val_ref.shape
    dp = out_ref.shape[-1]

    mask = mask_ref[...].astype(jnp.float32)                               # (TB, N)
    item_length = jnp.maximum(jnp.sum(mask, axis=1, keepdims=True), 1.0)   # (TB, 1)

    if n <= 32:
        # Per-neighbor accumulation: only one (TB, D) f32 slice live at a time,
        # avoiding full-tile f32 intermediates (keeps VMEM budget = the tiles).
        acc = jnp.zeros((tb, d), jnp.float32)
        for nn in range(n):                       # N is static & small -> unrolled
            v = val_ref[:, nn, :].astype(jnp.float32)          # (TB, D)
            acc = acc + v * mask[:, nn:nn + 1]                 # lane broadcast
    else:
        # Large-N fallback: multiply in the input dtype, accumulate the sum in f32.
        masked = val_ref[...] * mask.astype(val_ref.dtype)[:, :, None]
        acc = jnp.sum(masked, axis=1, dtype=jnp.float32)       # (TB, D)

    result = (acc / item_length).astype(out_ref.dtype)         # exact division

    if dp == d:
        out_ref[...] = result
    else:
        # Lane-dense 128-aligned output block: zero the whole block, then write the
        # D valid lanes.  The HBM writeback of the block stays a dense DMA.
        out_ref[...] = jnp.zeros((tb, dp), out_ref.dtype)
        out_ref[:, :d] = result


def cbow_encoder_forward(e1_embeded, rel_embeded, nei_embeded_key,
                         nei_embeded_value, nei_mask, dim):
    """Pallas-backed equivalent of CBOW_Encoder.forward for (B, N, D) values."""
    assert dim == 2, "kernel is specialized for (B, N, D) layout with dim=2"
    del e1_embeded, rel_embeded, nei_embeded_key  # unused by the torch forward

    B, N, D = nei_embeded_value.shape
    assert nei_mask.shape == (B, N)

    in_dtype = nei_embeded_value.dtype
    itemsize = jnp.dtype(in_dtype).itemsize

    # Mask stays 2-D (B, N): N sits on lanes, broadcast over D happens in-kernel.
    mask_f = nei_mask.astype(jnp.float32)

    # Lane-dense output block width (output is small; padding it is ~free).
    Dp = _round_up(D, 128)

    # --- per-generation VMEM budget / tile target ------------------------------
    try:
        vmem_cap = int(pltpu.get_tpu_info().vmem_capacity_bytes)
    except Exception:
        vmem_cap = 64 * 1024 * 1024                 # conservative (v7x-sized)
    if vmem_cap >= 100 * 1024 * 1024:               # v5e / v6e: 128 MiB VMEM
        target_tile_bytes = 24 * 1024 * 1024
        vmem_limit_bytes = 96 * 1024 * 1024
    else:                                           # v7x: 64 MiB VMEM per core
        target_tile_bytes = 12 * 1024 * 1024
        vmem_limit_bytes = 48 * 1024 * 1024

    # --- batch tile selection ---------------------------------------------------
    bytes_per_batch_row = max(N * D * itemsize, 1)
    tb = max(1, target_tile_bytes // bytes_per_batch_row)
    if tb >= B:
        tb = B                                      # whole batch in one block
    else:
        tb = max(8, (tb // 8) * 8)                  # sublane-aligned blocks
    if B >= 16:
        # Keep grid >= 2 so dimension_semantics=("parallel",) can shard the batch
        # axis across both v7x TensorCores.
        half = _round_up(pl.cdiv(B, 2), 8)
        tb = min(tb, half)
    tb = min(tb, B)

    grid = (pl.cdiv(B, tb),)

    out = pl.pallas_call(
        _cbow_kernel,
        out_shape=jax.ShapeDtypeStruct((B, Dp), in_dtype),
        grid=grid,
        in_specs=[
            pl.BlockSpec((tb, N, D), lambda i: (i, 0, 0)),
            pl.BlockSpec((tb, N), lambda i: (i, 0)),
        ],
        out_specs=pl.BlockSpec((tb, Dp), lambda i: (i, 0)),
        compiler_params=pltpu.CompilerParams(
            dimension_semantics=("parallel",),       # megacore sharding on v7x
            vmem_limit_bytes=vmem_limit_bytes,
        ),
    )(nei_embeded_value, mask_f)

    return out[:, :D] if Dp != D else out


if __name__ == "__main__":
    key = jax.random.PRNGKey(0)
    k1, k2, k3, k4, k5 = jax.random.split(key, 5)

    B, N, D = 2, 8, 32  # batch, neighbors, hidden

    # Accepted by the module signature but unused in forward.
    e1_embeded = jax.random.normal(k1, (B, D), dtype=jnp.float32)
    rel_embeded = jax.random.normal(k2, (B, D), dtype=jnp.float32)
    nei_embeded_key = jax.random.normal(k3, (B, N, D), dtype=jnp.float32)

    nei_embeded_value = jax.random.normal(k4, (B, N, D), dtype=jnp.float32)
    # 0/1 mask; include an all-zero row to exercise the max(., 1) clamp.
    nei_mask = (jax.random.uniform(k5, (B, N)) > 0.5).astype(jnp.float32)
    nei_mask = nei_mask.at[1].set(0.0)

    out = cbow_encoder_forward(e1_embeded, rel_embeded, nei_embeded_key,
                               nei_embeded_value, nei_mask, dim=2)
    out = jax.block_until_ready(out)

    # Reference check in plain JAX (mirrors the torch forward exactly).
    item_length = jnp.maximum(nei_mask.sum(-1, keepdims=True),
                              jnp.ones((B, 1), jnp.float32))
    ref = (nei_embeded_value * nei_mask[:, :, None]).sum(1) / item_length
    assert out.shape == (B, D)
    assert jnp.allclose(out, ref, atol=1e-5, rtol=1e-5)

    print("KERNEL_OK")
</pallas_src>

<mosaic_0001>
module attributes {stable_mosaic.version = 11 : i64} {
  func.func @_cbow_kernel(%arg0: i32, %arg1: memref<2x8x32xf32, #tpu.memory_space<vmem>>, %arg2: memref<2x8xf32, #tpu.memory_space<vmem>>, %arg3: memref<2x128xf32, #tpu.memory_space<vmem>>) attributes {dimension_semantics = [#tpu.dimension_semantics<parallel>], iteration_bounds = array<i64: 1>, scalar_prefetch = 0 : i64, scratch_operands = 0 : i64, tpu.core_type = #tpu.core_type<tc>, window_params = [{transform_indices = @transform_0, window_bounds = array<i64: 2, 8, 32>}, {transform_indices = @transform_1, window_bounds = array<i64: 2, 8>}, {transform_indices = @transform_2, window_bounds = array<i64: 2, 128>}]} {
    %c0 = arith.constant 0 : index
    %c0_0 = arith.constant 0 : index
    %0 = vector.load %arg2[%c0, %c0_0] : memref<2x8xf32, #tpu.memory_space<vmem>>, vector<2x8xf32>
    %cst = arith.constant dense<0.000000e+00> : vector<2xf32>
    %1 = vector.multi_reduction <add>, %0, %cst [1] : vector<2x8xf32> to vector<2xf32>
    %2 = vector.shape_cast %1 : vector<2xf32> to vector<2x1xf32>
    %cst_1 = arith.constant 1.000000e+00 : f32
    %3 = vector.broadcast %cst_1 : f32 to vector<2x1xf32>
    %4 = arith.maximumf %2, %3 : vector<2x1xf32>
    %cst_2 = arith.constant 0.000000e+00 : f32
    %5 = vector.broadcast %cst_2 : f32 to vector<2x32xf32>
    %c0_3 = arith.constant 0 : index
    %c0_4 = arith.constant 0 : index
    %c0_5 = arith.constant 0 : index
    %6 = vector.load %arg1[%c0_3, %c0_4, %c0_5] : memref<2x8x32xf32, #tpu.memory_space<vmem>>, vector<2x1x32xf32>
    %7 = vector.shape_cast %6 : vector<2x1x32xf32> to vector<2x32xf32>
    %8 = vector.extract_strided_slice %0 {offsets = [0, 0], sizes = [2, 1], strides = [1, 1]} : vector<2x8xf32> to vector<2x1xf32>
    %9 = vector.broadcast %8 : vector<2x1xf32> to vector<2x32xf32>
    %10 = arith.mulf %7, %9 : vector<2x32xf32>
    %11 = arith.addf %5, %10 : vector<2x32xf32>
    %c0_6 = arith.constant 0 : index
    %c1 = arith.constant 1 : index
    %c0_7 = arith.constant 0 : index
    %12 = vector.load %arg1[%c0_6, %c1, %c0_7] : memref<2x8x32xf32, #tpu.memory_space<vmem>>, vector<2x1x32xf32>
    %13 = vector.shape_cast %12 : vector<2x1x32xf32> to vector<2x32xf32>
    %14 = vector.extract_strided_slice %0 {offsets = [0, 1], sizes = [2, 1], strides = [1, 1]} : vector<2x8xf32> to vector<2x1xf32>
    %15 = vector.broadcast %14 : vector<2x1xf32> to vector<2x32xf32>
    %16 = arith.mulf %13, %15 : vector<2x32xf32>
    %17 = arith.addf %11, %16 : vector<2x32xf32>
    %c0_8 = arith.constant 0 : index
    %c2 = arith.constant 2 : index
    %c0_9 = arith.constant 0 : index
    %18 = vector.load %arg1[%c0_8, %c2, %c0_9] : memref<2x8x32xf32, #tpu.memory_space<vmem>>, vector<2x1x32xf32>
    %19 = vector.shape_cast %18 : vector<2x1x32xf32> to vector<2x32xf32>
    %20 = vector.extract_strided_slice %0 {offsets = [0, 2], sizes = [2, 1], strides = [1, 1]} : vector<2x8xf32> to vector<2x1xf32>
    %21 = vector.broadcast %20 : vector<2x1xf32> to vector<2x32xf32>
    %22 = arith.mulf %19, %21 : vector<2x32xf32>
    %23 = arith.addf %17, %22 : vector<2x32xf32>
    %c0_10 = arith.constant 0 : index
    %c3 = arith.constant 3 : index
    %c0_11 = arith.constant 0 : index
    %24 = vector.load %arg1[%c0_10, %c3, %c0_11] : memref<2x8x32xf32, #tpu.memory_space<vmem>>, vector<2x1x32xf32>
    %25 = vector.shape_cast %24 : vector<2x1x32xf32> to vector<2x32xf32>
    %26 = vector.extract_strided_slice %0 {offsets = [0, 3], sizes = [2, 1], strides = [1, 1]} : vector<2x8xf32> to vector<2x1xf32>
    %27 = vector.broadcast %26 : vector<2x1xf32> to vector<2x32xf32>
    %28 = arith.mulf %25, %27 : vector<2x32xf32>
    %29 = arith.addf %23, %28 : vector<2x32xf32>
    %c0_12 = arith.constant 0 : index
    %c4 = arith.constant 4 : index
    %c0_13 = arith.constant 0 : index
    %30 = vector.load %arg1[%c0_12, %c4, %c0_13] : memref<2x8x32xf32, #tpu.memory_space<vmem>>, vector<2x1x32xf32>
    %31 = vector.shape_cast %30 : vector<2x1x32xf32> to vector<2x32xf32>
    %32 = vector.extract_strided_slice %0 {offsets = [0, 4], sizes = [2, 1], strides = [1, 1]} : vector<2x8xf32> to vector<2x1xf32>
    %33 = vector.broadcast %32 : vector<2x1xf32> to vector<2x32xf32>
    %34 = arith.mulf %31, %33 : vector<2x32xf32>
    %35 = arith.addf %29, %34 : vector<2x32xf32>
    %c0_14 = arith.constant 0 : index
    %c5 = arith.constant 5 : index
    %c0_15 = arith.constant 0 : index
    %36 = vector.load %arg1[%c0_14, %c5, %c0_15] : memref<2x8x32xf32, #tpu.memory_space<vmem>>, vector<2x1x32xf32>
    %37 = vector.shape_cast %36 : vector<2x1x32xf32> to vector<2x32xf32>
    %38 = vector.extract_strided_slice %0 {offsets = [0, 5], sizes = [2, 1], strides = [1, 1]} : vector<2x8xf32> to vector<2x1xf32>
    %39 = vector.broadcast %38 : vector<2x1xf32> to vector<2x32xf32>
    %40 = arith.mulf %37, %39 : vector<2x32xf32>
    %41 = arith.addf %35, %40 : vector<2x32xf32>
    %c0_16 = arith.constant 0 : index
    %c6 = arith.constant 6 : index
    %c0_17 = arith.constant 0 : index
    %42 = vector.load %arg1[%c0_16, %c6, %c0_17] : memref<2x8x32xf32, #tpu.memory_space<vmem>>, vector<2x1x32xf32>
    %43 = vector.shape_cast %42 : vector<2x1x32xf32> to vector<2x32xf32>
    %44 = vector.extract_strided_slice %0 {offsets = [0, 6], sizes = [2, 1], strides = [1, 1]} : vector<2x8xf32> to vector<2x1xf32>
    %45 = vector.broadcast %44 : vector<2x1xf32> to vector<2x32xf32>
    %46 = arith.mulf %43, %45 : vector<2x32xf32>
    %47 = arith.addf %41, %46 : vector<2x32xf32>
    %c0_18 = arith.constant 0 : index
    %c7 = arith.constant 7 : index
    %c0_19 = arith.constant 0 : index
    %48 = vector.load %arg1[%c0_18, %c7, %c0_19] : memref<2x8x32xf32, #tpu.memory_space<vmem>>, vector<2x1x32xf32>
    %49 = vector.shape_cast %48 : vector<2x1x32xf32> to vector<2x32xf32>
    %50 = vector.extract_strided_slice %0 {offsets = [0, 7], sizes = [2, 1], strides = [1, 1]} : vector<2x8xf32> to vector<2x1xf32>
    %51 = vector.broadcast %50 : vector<2x1xf32> to vector<2x32xf32>
    %52 = arith.mulf %49, %51 : vector<2x32xf32>
    %53 = arith.addf %47, %52 : vector<2x32xf32>
    %54 = vector.broadcast %4 : vector<2x1xf32> to vector<2x32xf32>
    %55 = arith.divf %53, %54 : vector<2x32xf32>
    %cst_20 = arith.constant 0.000000e+00 : f32
    %56 = vector.broadcast %cst_20 : f32 to vector<2x128xf32>
    %c0_21 = arith.constant 0 : index
    %c0_22 = arith.constant 0 : index
    %57 = vector.load %arg3[%c0_21, %c0_22] : memref<2x128xf32, #tpu.memory_space<vmem>>, vector<2x128xf32>
    tpu.vector_store %arg3[%c0_21, %c0_22], %56 {strides = array<i32>} : memref<2x128xf32, #tpu.memory_space<vmem>>, vector<2x128xf32>,
    %c0_23 = arith.constant 0 : index
    %c0_24 = arith.constant 0 : index
    %58 = vector.load %arg3[%c0_23, %c0_24] : memref<2x128xf32, #tpu.memory_space<vmem>>, vector<2x32xf32>
    tpu.vector_store %arg3[%c0_23, %c0_24], %55 {strides = array<i32>} : memref<2x128xf32, #tpu.memory_space<vmem>>, vector<2x32xf32>,
    return
  }
  func.func @transform_0(%arg0: i32) -> (i32, i32, i32) {
    %c0_i32 = arith.constant 0 : i32
    %c0_i32_0 = arith.constant 0 : i32
    %c0_i32_1 = arith.constant 0 : i32
    return %arg0, %c0_i32, %c0_i32_0 : i32, i32, i32
  }
  func.func @transform_1(%arg0: i32) -> (i32, i32) {
    %c0_i32 = arith.constant 0 : i32
    %c0_i32_0 = arith.constant 0 : i32
    return %arg0, %c0_i32 : i32, i32
  }
  func.func @transform_2(%arg0: i32) -> (i32, i32) {
    %c0_i32 = arith.constant 0 : i32
    %c0_i32_0 = arith.constant 0 : i32
    return %arg0, %c0_i32 : i32, i32
  }
}

</mosaic_0001>

<llo_original>
// kernel: tpu_custom_call.1
$region0: #{tpu_custom_call.1}
  #allocation0 [shape = 'u32[]', space=smem, size = 0x4, offset = 0x4, fixed_abs, tag = 'smem constant byte address 0x4 - core index']
  #allocation1 [shape = 'u32[144,128]{1,0:T(1,128)}', space=vmem, size = 0x12000, scoped, tag = 'internal scratch']
  %s0 = inlined_call_operand.hbm [shape: f32[2,8,32], index: 0, kind: input, shape index: {}]
  %s1 = inlined_call_operand.vmem [shape: f32[2,8], index: 1, kind: input, shape index: {}]
  %s2 = inlined_call_operand.hbm [shape: f32[2,128], index: 2, kind: output, shape index: {}]
  %s3 = sld [smem:[#allocation0]]
  $region22: #{tpu_custom_call.1} parent=0
    _
  %s5 = ssub.s32 1, %s3
  %s6 = scalar_select 0, %s5, %s3
  $region1: #{tpu_custom_call.1} parent=0
    #allocation2 [shape = 'u8[8192]{0}', space=vmem, size = 0x2000, scoped, tag = 'input window, operand 0, single buffered']
    #allocation3 [shape = 's32[1]{0}', space=sflag, size = 0x4, scoped, tag = 'scoped memory for tpu_custom_call.1']
    #allocation4 [shape = 's32[1]{0}', space=sflag, size = 0x4, scoped, tag = 'scoped memory for tpu_custom_call.1']
    #allocation5 [shape = 'u8[1024]{0}', space=vmem, size = 0x400, scoped, tag = 'output window, operand 0, single buffered']
    %7 = vsyncpa [#allocation3], 0
    %8 = vsyncpa [#allocation4], 0
    // Predicated region
    $region2: #{tpu_custom_call.1} parent=1 // pred_check
      _
    $region3: #{tpu_custom_call.1} parent=1 // pred_check_branch
      %10 = sbr.rel (0) target = $region5
    $region4: #{tpu_custom_call.1} parent=1 // pred_region
      %s12 = ssub.s32 256, 256
      %13 = vsyncadd [#allocation3], %s12
      %s14 = sshll.u32 [#allocation2], 4
      %s15 = int_to_ptr.vmem [resolvable:$true] %s14
      %20 = dma.hbm_to_vmem [thread:$0]  %s0, 256, %s15, [#allocation3], 128, 128, 8
    $region5: #{tpu_custom_call.1} parent=1 // pred_fallthru
      _
    // Predicated region
    $region6: #{tpu_custom_call.1} parent=1 // pred_check
      _
    $region7: #{tpu_custom_call.1} parent=1 // pred_check_branch
      %22 = sbr.rel (0) target = $region9
    $region8: #{tpu_custom_call.1} parent=1 // pred_region
      _
    $region9: #{tpu_custom_call.1} parent=1 // pred_fallthru
      _
    // Predicated region
    $region10: #{tpu_custom_call.1} parent=1 // pred_check
      _
    $region11: #{tpu_custom_call.1} parent=1 // pred_check_branch
      %24 = sbr.rel (0) target = $region13
    $region12: #{tpu_custom_call.1} parent=1 // pred_region
      %25 = dma.done [#allocation3], 256
    $region13: #{tpu_custom_call.1} parent=1 // pred_fallthru
      _
    %v26 = vld [vmem:[%s1] sm:$0x3]
    %vm27 = vcmask 58368
    %v28 = vsel %vm27, %v26, 0.0
    %29 = vadd.xlane.f32.xlu0 %v28
    %v30 = vpop.xlane.xlu0 %29
    %v31 = vmax.f32 %v30, 1.0
    %v32 = vld [vmem:[#allocation2] sm:$0x1]
    %v33 = vld [vmem:[#allocation2 + $0x8] sm:$0x1]
    %35 = vset.pattern.permute.xlu0 0
    %36 = vperm.xlu0 %35, %v26
    %v37 = vpop.permute.xlu0 %36
    %v38 = vrot.slane %v37, 1
    %v41 = vmul.f32 %v32, %v37
    %v42 = vmul.f32 %v33, %v38
    %v43 = vadd.f32 %v41, 0.0
    %v44 = vadd.f32 %v42, 0.0
    %v45 = vld [vmem:[#allocation2 + $0x1] sm:$0x1]
    %v46 = vld [vmem:[#allocation2 + $0x9] sm:$0x1]
    %47 = vset.pattern.permute.xlu0 1
    %48 = vperm.xlu0 %47, %v26
    %v49 = vpop.permute.xlu0 %48
    %v50 = vrot.slane %v49, 1
    %v53 = vmul.f32 %v45, %v49
    %v54 = vmul.f32 %v46, %v50
    %v55 = vadd.f32 %v43, %v53
    %v56 = vadd.f32 %v44, %v54
    %v57 = vld [vmem:[#allocation2 + $0x2] sm:$0x1]
    %v58 = vld [vmem:[#allocation2 + $0xa] sm:$0x1]
    %59 = vset.pattern.permute.xlu0 2
    %60 = vperm.xlu0 %59, %v26
    %v61 = vpop.permute.xlu0 %60
    %v62 = vrot.slane %v61, 1
    %v65 = vmul.f32 %v57, %v61
    %v66 = vmul.f32 %v58, %v62
    %v67 = vadd.f32 %v55, %v65
    %v68 = vadd.f32 %v56, %v66
    %v69 = vld [vmem:[#allocation2 + $0x3] sm:$0x1]
    %v70 = vld [vmem:[#allocation2 + $0xb] sm:$0x1]
    %71 = vset.pattern.permute.xlu0 3
    %72 = vperm.xlu0 %71, %v26
    %v73 = vpop.permute.xlu0 %72
    %v74 = vrot.slane %v73, 1
    %v77 = vmul.f32 %v69, %v73
    %v78 = vmul.f32 %v70, %v74
    %v79 = vadd.f32 %v67, %v77
    %v80 = vadd.f32 %v68, %v78
    %v81 = vld [vmem:[#allocation2 + $0x4] sm:$0x1]
    %v82 = vld [vmem:[#allocation2 + $0xc] sm:$0x1]
    %83 = vset.pattern.permute.xlu0 4
    %84 = vperm.xlu0 %83, %v26
    %v85 = vpop.permute.xlu0 %84
    %v86 = vrot.slane %v85, 1
    %v89 = vmul.f32 %v81, %v85
    %v90 = vmul.f32 %v82, %v86
    %v91 = vadd.f32 %v79, %v89
    %v92 = vadd.f32 %v80, %v90
    %v93 = vld [vmem:[#allocation2 + $0x5] sm:$0x1]
    %v94 = vld [vmem:[#allocation2 + $0xd] sm:$0x1]
    %95 = vset.pattern.permute.xlu0 5
    %96 = vperm.xlu0 %95, %v26
    %v97 = vpop.permute.xlu0 %96
    %v98 = vrot.slane %v97, 1
    %v101 = vmul.f32 %v93, %v97
    %v102 = vmul.f32 %v94, %v98
    %v103 = vadd.f32 %v91, %v101
    %v104 = vadd.f32 %v92, %v102
    %v105 = vld [vmem:[#allocation2 + $0x6] sm:$0x1]
    %v106 = vld [vmem:[#allocation2 + $0xe] sm:$0x1]
    %107 = vset.pattern.permute.xlu0 6
    %108 = vperm.xlu0 %107, %v26
    %v109 = vpop.permute.xlu0 %108
    %v110 = vrot.slane %v109, 1
    %v113 = vmul.f32 %v105, %v109
    %v114 = vmul.f32 %v106, %v110
    %v115 = vadd.f32 %v103, %v113
    %v116 = vadd.f32 %v104, %v114
    %v117 = vld [vmem:[#allocation2 + $0x7] sm:$0x1]
    %v118 = vld [vmem:[#allocation2 + $0xf] sm:$0x1]
    %119 = vset.pattern.permute.xlu0 7
    %120 = vperm.xlu0 %119, %v26
    %v121 = vpop.permute.xlu0 %120
    %v122 = vrot.slane %v121, 1
    %v125 = vmul.f32 %v117, %v121
    %v126 = vmul.f32 %v118, %v122
    %v127 = vadd.f32 %v115, %v125
    %v128 = vadd.f32 %v116, %v126
    %v130 = vrot.slane %v31, 1
    %v133 = vrcp.pop %v31
    %v134 = vmul.f32 %v127, %v133
    %v135 = vrcp.pop %v130
    %v136 = vmul.f32 %v128, %v135
    %137 = vst [vmem:[#allocation5] sm:$0x3] 0.0
    %v140 = vrot.slane %v136, 7
    %vm141 = vcmask 1041409
    %v142 = vsel %vm141, %v140, %v134
    %vm144 = vcmask 254976
    %145 = vst.msk [vmem:[#allocation5] sm:$0x3] %vm144, %v142
    // Predicated region
    $region14: #{tpu_custom_call.1} parent=1 // pred_check
      _
    $region15: #{tpu_custom_call.1} parent=1 // pred_check_branch
      %147 = sbr.rel (0) target = $region17
    $region16: #{tpu_custom_call.1} parent=1 // pred_region
      %s149 = ssub.s32 32, 32
      %150 = vsyncadd [#allocation4], %s149
      %s152 = sshll.u32 [#allocation5], 4
      %s153 = int_to_ptr.vmem [resolvable:$true] %s152
      %155 = dma.vmem_to_hbm [thread:$0]  %s153, 32, %s2, [#allocation4]
    $region17: #{tpu_custom_call.1} parent=1 // pred_fallthru
      _
    // Predicated region
    $region18: #{tpu_custom_call.1} parent=1 // pred_check
      _
    $region19: #{tpu_custom_call.1} parent=1 // pred_check_branch
      %157 = sbr.rel (0) target = $region21
    $region20: #{tpu_custom_call.1} parent=1 // pred_region
      %158 = dma.done [#allocation4], 32
    $region21: #{tpu_custom_call.1} parent=1 // pred_fallthru
      _
    %159 = vsyncpa [#allocation3], 1
    %160 = vsyncpa [#allocation4], 1

</llo_original>
